<compile_context>
chip_gen: v7x
topology: tpu7x:2x2x1
jax: 0.10.0
libtpu: 0.0.40
codegen_flags: <defaults>
</compile_context>

<pallas_src>
import math

import jax
import jax.numpy as jnp
from jax.experimental import pallas as pl
from jax.experimental.pallas import tpu as pltpu

CIN1_PAD = 8  # conv1's 3 input channels zero-padded to 8 lanes (not 64)


# ----------------------------------------------------------------------------
# In-kernel helpers
# ----------------------------------------------------------------------------
def _zero_halo(pad_ref, p, H, W):
    """Zero only the halo (border) of a (N, H+2p, W+2p, C) scratch buffer."""
    n, hp, wp, c = pad_ref.shape
    dt = pad_ref.dtype
    pad_ref[:, 0:p, :, :] = jnp.zeros((n, p, wp, c), dt)
    pad_ref[:, p + H:hp, :, :] = jnp.zeros((n, hp - (p + H), wp, c), dt)
    pad_ref[:, :, 0:p, :] = jnp.zeros((n, hp, p, c), dt)
    pad_ref[:, :, p + W:wp, :] = jnp.zeros((n, hp, wp - (p + W), c), dt)


def _conv_from_pad(pad_ref, tap_w, bias, N, H, W, K, Cin):
    """KxK stride-1 conv read from a zero-padded VMEM scratch.

    Per-tap matmuls (N*H*W, Cin) x (Cin, Cout): a single tap already has
    enough contraction depth for the MXU at Cin>=64 and avoids lane-axis
    concatenations / oversized im2col registers.  Returns f32 (N*H*W, Cout).
    """
    acc = None
    for dy in range(K):
        for dx in range(K):
            patch = pad_ref[:, dy:dy + H, dx:dx + W, :].reshape(N * H * W, Cin)
            d = jnp.dot(patch, tap_w(dy, dx), preferred_element_type=jnp.float32)
            acc = d if acc is None else acc + d
    return acc + bias


# ----------------------------------------------------------------------------
# Generic stride-1 "same" conv (in-kernel zero pad, fused bias + activation)
# ----------------------------------------------------------------------------
def _make_conv_kernel(K, N, H, W, Cin, Cout, act, alpha):
    P = K // 2

    def kernel(x_ref, w_ref, b_ref, o_ref, pad_ref):
        _zero_halo(pad_ref, P, H, W)
        pad_ref[:, P:P + H, P:P + W, :] = x_ref[...]
        acc = _conv_from_pad(pad_ref, lambda dy, dx: w_ref[dy, dx],
                             b_ref[...], N, H, W, K, Cin)
        if act == "relu":
            acc = jnp.maximum(acc, 0.0)
        elif act == "leaky":
            acc = jnp.where(acc > 0, acc, alpha * acc)
        o_ref[...] = acc.reshape(N, H, W, Cout).astype(o_ref.dtype)

    return kernel


def conv2d_same(x, w, b, *, act="none", alpha=0.0):
    """KxK stride-1 pad-(K//2) conv, NHWC / HWIO.  Whole batch in one call."""
    N, H, W, Cin = x.shape
    K, Cout = w.shape[0], w.shape[-1]
    P = K // 2
    return pl.pallas_call(
        _make_conv_kernel(K, N, H, W, Cin, Cout, act, alpha),
        out_shape=jax.ShapeDtypeStruct((N, H, W, Cout), x.dtype),
        scratch_shapes=[pltpu.VMEM((N, H + 2 * P, W + 2 * P, Cin), x.dtype)],
    )(x, w, b)


# ----------------------------------------------------------------------------
# Fused residual chain: 6 x (conv3x3 -> ReLU -> conv3x3 -> +residual) plus the
# stage-level skip, one pallas_call, grid over the layer axis only.
# ----------------------------------------------------------------------------
def _make_reschain_kernel(N, H, W, C, L):
    def kernel(x_ref, w_ref, b_ref, o_ref, pad_ref):
        l = pl.program_id(0)

        @pl.when(l == 0)
        def _():
            _zero_halo(pad_ref, 1, H, W)
            pad_ref[:, 1:H + 1, 1:W + 1, :] = x_ref[...]

        def conv(widx):
            return _conv_from_pad(pad_ref,
                                  lambda dy, dx: w_ref[0, widx, dy, dx],
                                  b_ref[0, widx], N, H, W, 3, C)

        # Residual of this block = current activation (interior of pad buffer).
        res = pad_ref[:, 1:H + 1, 1:W + 1, :].reshape(N * H * W, C)
        res = res.astype(jnp.float32)
        h = jnp.maximum(conv(0), 0.0)                       # conv1 -> ReLU
        pad_ref[:, 1:H + 1, 1:W + 1, :] = h.reshape(N, H, W, C).astype(pad_ref.dtype)
        y = conv(1) + res                                   # conv2 + residual
        pad_ref[:, 1:H + 1, 1:W + 1, :] = y.reshape(N, H, W, C).astype(pad_ref.dtype)

        @pl.when(l == L - 1)
        def _():
            # Stage skip: out = resBlockN(con) + con.  The out block index is
            # constant across the layer axis, so the output stays resident in
            # VMEM and is written back to HBM once after the last layer.
            o_ref[...] = (y.reshape(N, H, W, C)
                          + x_ref[...].astype(jnp.float32)).astype(o_ref.dtype)

    return kernel


def res_chain(x, wstack, bstack):
    """x: (N,H,W,C) bf16; wstack: (L,2,3,3,C,C) bf16; bstack: (L,2,1,C) f32."""
    N, H, W, C = x.shape
    L = wstack.shape[0]
    return pl.pallas_call(
        _make_reschain_kernel(N, H, W, C, L),
        out_shape=jax.ShapeDtypeStruct((N, H, W, C), x.dtype),
        grid=(L,),
        in_specs=[
            pl.BlockSpec((N, H, W, C), lambda l: (0, 0, 0, 0)),
            pl.BlockSpec((1, 2, 3, 3, C, C), lambda l: (l, 0, 0, 0, 0, 0)),
            pl.BlockSpec((1, 2, 1, C), lambda l: (l, 0, 0, 0)),
        ],
        out_specs=pl.BlockSpec((N, H, W, C), lambda l: (0, 0, 0, 0)),
        scratch_shapes=[pltpu.VMEM((N, H + 2, W + 2, C), x.dtype)],
        compiler_params=pltpu.CompilerParams(dimension_semantics=("arbitrary",)),
    )(x, wstack, bstack)


# ----------------------------------------------------------------------------
# Stride-2 3x3 conv + ReLU: phase-split (space-to-depth) input, in-kernel pad
# and im2col -- no 9x patch tensor in HBM.
# ----------------------------------------------------------------------------
def _make_s2_kernel(N, Ho, Wo, Cin, Cout):
    def kernel(ph_ref, w_ref, b_ref, o_ref, pad_ref):
        dt = pad_ref.dtype
        pad_ref[:, :, 0:1, :, :] = jnp.zeros((N, 4, 1, Wo + 1, Cin), dt)
        pad_ref[:, :, :, 0:1, :] = jnp.zeros((N, 4, Ho + 1, 1, Cin), dt)
        pad_ref[:, :, 1:Ho + 1, 1:Wo + 1, :] = ph_ref[...]

        acc = None
        for dy in range(3):
            for dx in range(3):
                ry = 0 if dy == 1 else 1        # input-row parity of this tap
                rx = 0 if dx == 1 else 1        # input-col parity of this tap
                rs = 0 if dy == 0 else 1        # row offset into padded plane
                cs = 0 if dx == 0 else 1
                p = 2 * ry + rx
                patch = pad_ref[:, p, rs:rs + Ho, cs:cs + Wo, :]
                patch = patch.reshape(N * Ho * Wo, Cin)
                d = jnp.dot(patch, w_ref[dy, dx],
                            preferred_element_type=jnp.float32)
                acc = d if acc is None else acc + d
        acc = jnp.maximum(acc + b_ref[...], 0.0)            # fused ReLU
        o_ref[...] = acc.reshape(N, Ho, Wo, Cout).astype(o_ref.dtype)

    return kernel


def conv2d_stride2(x, w, b):
    N, H, W, Cin = x.shape
    Cout = w.shape[-1]
    Ho, Wo = H // 2, W // 2
    # XLA only does a 4-plane parity split (same total bytes as x).
    phases = jnp.stack(
        [x[:, ry::2, rx::2, :] for ry in (0, 1) for rx in (0, 1)], axis=1)
    return pl.pallas_call(
        _make_s2_kernel(N, Ho, Wo, Cin, Cout),
        out_shape=jax.ShapeDtypeStruct((N, Ho, Wo, Cout), x.dtype),
        scratch_shapes=[pltpu.VMEM((N, 4, Ho + 1, Wo + 1, Cin), x.dtype)],
    )(phases, w, b)


# ----------------------------------------------------------------------------
# Fused tail: 7x7 conv (-> deblur_feature), +con1 skip, conv3x3+ReLU, conv3x3
# ----------------------------------------------------------------------------
def _make_tail_kernel(N, H, W, C, Cout):
    def kernel(x_ref, con1_ref, w7_ref, b7_ref, wa_ref, ba_ref, wb_ref, bb_ref,
               feat_ref, out_ref, pad7_ref, pad3_ref):
        # 7x7 conv (tail of deconv2), no activation -> deblur_feature
        _zero_halo(pad7_ref, 3, H, W)
        pad7_ref[:, 3:3 + H, 3:3 + W, :] = x_ref[...]
        feat = _conv_from_pad(pad7_ref, lambda dy, dx: w7_ref[dy, dx],
                              b7_ref[...], N, H, W, 7, C)
        feat_ref[...] = feat.reshape(N, H, W, C).astype(feat_ref.dtype)

        # convout( deblur_feature + con1 ): conv3x3 -> ReLU -> conv3x3
        s = feat + con1_ref[...].reshape(N * H * W, C).astype(jnp.float32)
        _zero_halo(pad3_ref, 1, H, W)
        pad3_ref[:, 1:H + 1, 1:W + 1, :] = s.reshape(N, H, W, C).astype(pad3_ref.dtype)
        h = jnp.maximum(
            _conv_from_pad(pad3_ref, lambda dy, dx: wa_ref[dy, dx],
                           ba_ref[...], N, H, W, 3, C), 0.0)
        pad3_ref[:, 1:H + 1, 1:W + 1, :] = h.reshape(N, H, W, C).astype(pad3_ref.dtype)
        out = _conv_from_pad(pad3_ref, lambda dy, dx: wb_ref[dy, dx],
                             bb_ref[...], N, H, W, 3, C)
        out_ref[...] = out.reshape(N, H, W, Cout).astype(out_ref.dtype)

    return kernel


def tail_fused(up2, con1, p):
    N, H, W, C = up2.shape
    Cout = p["outb_w"].shape[-1]
    return pl.pallas_call(
        _make_tail_kernel(N, H, W, C, Cout),
        out_shape=(jax.ShapeDtypeStruct((N, H, W, C), up2.dtype),
                   jax.ShapeDtypeStruct((N, H, W, Cout), up2.dtype)),
        scratch_shapes=[pltpu.VMEM((N, H + 6, W + 6, C), up2.dtype),
                        pltpu.VMEM((N, H + 2, W + 2, C), up2.dtype)],
    )(up2, con1, p["tail7_w"], p["tail7_b"], p["outa_w"], p["outa_b"],
      p["outb_w"], p["outb_b"])


# ----------------------------------------------------------------------------
# Pixel shuffle (matches torch.nn.PixelShuffle ordering) and the exact
# ConvTranspose2d(4,4,stride=2,pad=1) -> 3x3-conv + shuffle re-expression.
# ----------------------------------------------------------------------------
def pixel_shuffle(x, r):
    # TODO(synk): fuse this interleave into the deconv kernel's output store.
    N, H, W, Crr = x.shape
    C = Crr // (r * r)
    x = x.reshape(N, H, W, C, r, r)
    x = jnp.transpose(x, (0, 1, 4, 2, 5, 3))
    return x.reshape(N, H * r, W * r, C)


def convtranspose_as_conv3(wt, bias):
    """ConvTranspose2d(cin,cout,4,stride=2,padding=1) == 3x3 stride-1 pad-1
    conv to 4*cout phase channels (index co*4 + rh*2 + rw) + PixelShuffle(2).
    Output row 2i+rh gathers taps  rh=0:{dy0<-kh3, dy1<-kh1},
    rh=1:{dy1<-kh2, dy2<-kh0}; columns identical."""
    cin, cout = wt.shape[0], wt.shape[1]
    w3 = jnp.zeros((3, 3, cin, cout, 2, 2), wt.dtype)
    taps = {0: {0: 3, 1: 1}, 1: {1: 2, 2: 0}}
    for rh in (0, 1):
        for dy, kh in taps[rh].items():
            for rw in (0, 1):
                for dx, kw in taps[rw].items():
                    w3 = w3.at[dy, dx, :, :, rh, rw].set(wt[:, :, kh, kw])
    w3 = w3.reshape(3, 3, cin, cout * 4)
    b4 = jnp.repeat(bias, 4).reshape(1, cout * 4)
    return w3, b4


def convtranspose_ref(x, wt, bias):
    """Reference ConvTranspose2d(k=4,s=2,p=1) via lhs-dilated convolution."""
    w_conv = jnp.transpose(wt[:, :, ::-1, ::-1], (2, 3, 0, 1))   # HWIO
    y = jax.lax.conv_general_dilated(
        x, w_conv, window_strides=(1, 1), padding=((2, 2), (2, 2)),
        lhs_dilation=(2, 2), dimension_numbers=("NHWC", "HWIO", "NHWC"))
    return y + bias.reshape(1, 1, 1, -1)


# ----------------------------------------------------------------------------
# Parameters (init distributions mirror the module; exact RNG need not match).
# ----------------------------------------------------------------------------
def init_params(key):
    ks = list(jax.random.split(key, 11))
    bf16 = jnp.bfloat16

    def conv_w(k, kh, kw, cin, cout):
        std = math.sqrt(2.0 / (kh * kw * cout))
        return jax.random.normal(k, (kh, kw, cin, cout), jnp.float32) * std

    def res_stack(k, C, L=6):
        keys = jax.random.split(k, 2 * L)
        ws = []
        for i in range(L):
            ws.append(jnp.stack([conv_w(keys[2 * i], 3, 3, C, C),
                                 conv_w(keys[2 * i + 1], 3, 3, C, C)]))
        wstack = jnp.stack(ws).astype(bf16)               # (L,2,3,3,C,C)
        bstack = jnp.zeros((L, 2, 1, C), jnp.float32)     # Conv2d biases zeroed
        return wstack, bstack

    def deconv(k, cin, cout):
        kw_, kb_ = jax.random.split(k)
        bound = 1.0 / math.sqrt(cin * 16)
        wt = jax.random.uniform(kw_, (cin, cout, 4, 4), jnp.float32, -bound, bound)
        bias = jax.random.uniform(kb_, (cout,), jnp.float32, -bound, bound)
        w3, b4 = convtranspose_as_conv3(wt, bias)
        return w3.astype(bf16), b4

    p = {}
    w1 = conv_w(ks[0], 7, 7, 3, 64)                       # input chans 3 -> 8
    p["conv1_w"] = jnp.pad(w1, ((0, 0), (0, 0), (0, CIN1_PAD - 3), (0, 0))).astype(bf16)
    p["conv1_b"] = jnp.zeros((1, 64), jnp.float32)

    p["res1_w"], p["res1_b"] = res_stack(ks[1], 64)
    p["conv2_w"] = conv_w(ks[2], 3, 3, 64, 128).astype(bf16)
    p["conv2_b"] = jnp.zeros((1, 128), jnp.float32)
    p["res2_w"], p["res2_b"] = res_stack(ks[3], 128)
    p["conv3_w"] = conv_w(ks[4], 3, 3, 128, 256).astype(bf16)
    p["conv3_b"] = jnp.zeros((1, 256), jnp.float32)
    p["res3_w"], p["res3_b"] = res_stack(ks[5], 256)

    p["deconv1_w"], p["deconv1_b"] = deconv(ks[6], 256, 128)
    p["deconv2_w"], p["deconv2_b"] = deconv(ks[7], 128, 64)

    p["tail7_w"] = conv_w(ks[8], 7, 7, 64, 64).astype(bf16)
    p["tail7_b"] = jnp.zeros((1, 64), jnp.float32)
    p["outa_w"] = conv_w(ks[9], 3, 3, 64, 64).astype(bf16)
    p["outa_b"] = jnp.zeros((1, 64), jnp.float32)
    p["outb_w"] = conv_w(ks[10], 3, 3, 64, 3).astype(bf16)
    p["outb_b"] = jnp.zeros((1, 3), jnp.float32)
    return p


# ----------------------------------------------------------------------------
# Forward pass of _DeblurringMoudle on NHWC input x: (N, H, W, 3).
# ----------------------------------------------------------------------------
def deblurring_forward(params, x):
    # bf16 activations on the wire; every matmul accumulates in f32.
    x = x.astype(jnp.bfloat16)
    x = jnp.pad(x, ((0, 0), (0, 0), (0, 0), (0, CIN1_PAD - x.shape[-1])))

    # conv1 (7x7) + LeakyReLU(0.2)
    con1 = conv2d_same(x, params["conv1_w"], params["conv1_b"],
                       act="leaky", alpha=0.2)

    # resBlock1 (+ stage skip) -> conv2(s2) -> resBlock2 -> conv3(s2) -> resBlock3
    res1 = res_chain(con1, params["res1_w"], params["res1_b"])
    con2 = conv2d_stride2(res1, params["conv2_w"], params["conv2_b"])
    res2 = res_chain(con2, params["res2_w"], params["res2_b"])
    con3 = conv2d_stride2(res2, params["conv3_w"], params["conv3_b"])
    res3 = res_chain(con3, params["res3_w"], params["res3_b"])

    # deconv1/deconv2: ConvT(4,4,s2,p1)+ReLU == fused 3x3 conv (phase channels)
    # + PixelShuffle(2); the ReLU commutes with the channel->space permutation.
    d1 = conv2d_same(res3, params["deconv1_w"], params["deconv1_b"], act="relu")
    decon1 = pixel_shuffle(d1, 2)
    d2 = conv2d_same(decon1, params["deconv2_w"], params["deconv2_b"], act="relu")
    up2 = pixel_shuffle(d2, 2)

    # deconv2's trailing 7x7 conv, the con1 skip and both convout convs fused.
    deblur_feature, deblur_out = tail_fused(up2, con1, params)
    return deblur_feature, deblur_out


if __name__ == "__main__":
    key = jax.random.PRNGKey(0)
    k_param, k_x, k_tw, k_tb, k_tx = jax.random.split(key, 5)

    # Unit check (review concern): ConvTranspose2d(4,2,1) == fused 3x3 conv
    # (phase channels) + PixelShuffle, including the bias repeat ordering.
    wt = jax.random.uniform(k_tw, (8, 4, 4, 4), jnp.float32, -0.1, 0.1)
    bt = jax.random.uniform(k_tb, (4,), jnp.float32, -0.1, 0.1)
    xt = jax.random.normal(k_tx, (1, 4, 4, 8), jnp.float32)
    w3t, b4t = convtranspose_as_conv3(wt, bt)
    got = pixel_shuffle(conv2d_same(xt, w3t, b4t, act="none"), 2)
    ref = convtranspose_ref(xt, wt, bt)
    err = float(jnp.max(jnp.abs(got - ref)))
    assert err < 1e-3, f"deconv-as-conv mismatch: {err}"

    # Full forward.  NHWC input (N=2, H=16, W=16, C=3) <-> torch NCHW (2,3,16,16).
    params = init_params(k_param)
    x = jax.random.normal(k_x, (2, 16, 16, 3), jnp.float32)
    fwd = jax.jit(deblurring_forward)
    deblur_feature, deblur_out = fwd(params, x)
    jax.block_until_ready((deblur_feature, deblur_out))

    assert deblur_feature.shape == (2, 16, 16, 64), deblur_feature.shape
    assert deblur_out.shape == (2, 16, 16, 3), deblur_out.shape
    assert bool(jnp.all(jnp.isfinite(deblur_feature.astype(jnp.float32))))
    assert bool(jnp.all(jnp.isfinite(deblur_out.astype(jnp.float32))))
    print("KERNEL_OK")
</pallas_src>

<mosaic_0001>
module attributes {stable_mosaic.version = 11 : i64} {
  func.func @kernel(%arg0: memref<1x4x4x8xf32, #tpu.memory_space<vmem>>, %arg1: memref<3x3x8x16xf32, #tpu.memory_space<vmem>>, %arg2: memref<1x16xf32, #tpu.memory_space<vmem>>, %arg3: memref<1x4x4x16xf32, #tpu.memory_space<vmem>>, %arg4: memref<1x6x6x8xf32, #tpu.memory_space<vmem>>) attributes {dimension_semantics = [], scalar_prefetch = 0 : i64, scratch_operands = 1 : i64, tpu.core_type = #tpu.core_type<tc>} {
    %cst = arith.constant 0.000000e+00 : f32
    %0 = vector.broadcast %cst : f32 to vector<1x1x6x8xf32>
    %c0 = arith.constant 0 : index
    %c0_0 = arith.constant 0 : index
    %c0_1 = arith.constant 0 : index
    %c0_2 = arith.constant 0 : index
    %1 = vector.load %arg4[%c0, %c0_0, %c0_1, %c0_2] : memref<1x6x6x8xf32, #tpu.memory_space<vmem>>, vector<1x1x6x8xf32>
    tpu.vector_store %arg4[%c0, %c0_0, %c0_1, %c0_2], %0 {strides = array<i32>} : memref<1x6x6x8xf32, #tpu.memory_space<vmem>>, vector<1x1x6x8xf32>,
    %cst_3 = arith.constant 0.000000e+00 : f32
    %2 = vector.broadcast %cst_3 : f32 to vector<1x1x6x8xf32>
    %c0_4 = arith.constant 0 : index
    %c5 = arith.constant 5 : index
    %c0_5 = arith.constant 0 : index
    %c0_6 = arith.constant 0 : index
    %3 = vector.load %arg4[%c0_4, %c5, %c0_5, %c0_6] : memref<1x6x6x8xf32, #tpu.memory_space<vmem>>, vector<1x1x6x8xf32>
    tpu.vector_store %arg4[%c0_4, %c5, %c0_5, %c0_6], %2 {strides = array<i32>} : memref<1x6x6x8xf32, #tpu.memory_space<vmem>>, vector<1x1x6x8xf32>,
    %cst_7 = arith.constant 0.000000e+00 : f32
    %4 = vector.broadcast %cst_7 : f32 to vector<1x6x1x8xf32>
    %c0_8 = arith.constant 0 : index
    %c0_9 = arith.constant 0 : index
    %c0_10 = arith.constant 0 : index
    %c0_11 = arith.constant 0 : index
    %5 = vector.load %arg4[%c0_8, %c0_9, %c0_10, %c0_11] : memref<1x6x6x8xf32, #tpu.memory_space<vmem>>, vector<1x6x1x8xf32>
    tpu.vector_store %arg4[%c0_8, %c0_9, %c0_10, %c0_11], %4 {strides = array<i32>} : memref<1x6x6x8xf32, #tpu.memory_space<vmem>>, vector<1x6x1x8xf32>,
    %cst_12 = arith.constant 0.000000e+00 : f32
    %6 = vector.broadcast %cst_12 : f32 to vector<1x6x1x8xf32>
    %c0_13 = arith.constant 0 : index
    %c0_14 = arith.constant 0 : index
    %c5_15 = arith.constant 5 : index
    %c0_16 = arith.constant 0 : index
    %7 = vector.load %arg4[%c0_13, %c0_14, %c5_15, %c0_16] : memref<1x6x6x8xf32, #tpu.memory_space<vmem>>, vector<1x6x1x8xf32>
    tpu.vector_store %arg4[%c0_13, %c0_14, %c5_15, %c0_16], %6 {strides = array<i32>} : memref<1x6x6x8xf32, #tpu.memory_space<vmem>>, vector<1x6x1x8xf32>,
    %c0_17 = arith.constant 0 : index
    %c0_18 = arith.constant 0 : index
    %c0_19 = arith.constant 0 : index
    %c0_20 = arith.constant 0 : index
    %8 = vector.load %arg0[%c0_17, %c0_18, %c0_19, %c0_20] : memref<1x4x4x8xf32, #tpu.memory_space<vmem>>, vector<1x4x4x8xf32>
    %c0_21 = arith.constant 0 : index
    %c1 = arith.constant 1 : index
    %c1_22 = arith.constant 1 : index
    %c0_23 = arith.constant 0 : index
    %9 = vector.load %arg4[%c0_21, %c1, %c1_22, %c0_23] : memref<1x6x6x8xf32, #tpu.memory_space<vmem>>, vector<1x4x4x8xf32>
    tpu.vector_store %arg4[%c0_21, %c1, %c1_22, %c0_23], %8 {strides = array<i32>} : memref<1x6x6x8xf32, #tpu.memory_space<vmem>>, vector<1x4x4x8xf32>,
    %c0_24 = arith.constant 0 : index
    %c0_25 = arith.constant 0 : index
    %10 = vector.load %arg2[%c0_24, %c0_25] : memref<1x16xf32, #tpu.memory_space<vmem>>, vector<1x16xf32>
    %c0_26 = arith.constant 0 : index
    %c0_27 = arith.constant 0 : index
    %c0_28 = arith.constant 0 : index
    %c0_29 = arith.constant 0 : index
    %11 = vector.load %arg4[%c0_26, %c0_27, %c0_28, %c0_29] : memref<1x6x6x8xf32, #tpu.memory_space<vmem>>, vector<1x4x4x8xf32>
    %12 = vector.shape_cast %11 : vector<1x4x4x8xf32> to vector<16x8xf32>
    %c0_30 = arith.constant 0 : index
    %c0_31 = arith.constant 0 : index
    %c0_32 = arith.constant 0 : index
    %c0_33 = arith.constant 0 : index
    %13 = vector.load %arg1[%c0_30, %c0_31, %c0_32, %c0_33] : memref<3x3x8x16xf32, #tpu.memory_space<vmem>>, vector<1x1x8x16xf32>
    %14 = vector.shape_cast %13 : vector<1x1x8x16xf32> to vector<8x16xf32>
    %cst_34 = arith.constant dense<0.000000e+00> : vector<16x16xf32>
    %15 = tpu.matmul %12, %14, %cst_34 {dimension_numbers = #tpu.dot_dimension_numbers<[1], [0], [0], [1], [0, 0, 1, 1], [], []>} : vector<16x8xf32>, vector<8x16xf32>, vector<16x16xf32> -> vector<16x16xf32>
    %c0_35 = arith.constant 0 : index
    %c0_36 = arith.constant 0 : index
    %c1_37 = arith.constant 1 : index
    %c0_38 = arith.constant 0 : index
    %16 = vector.load %arg4[%c0_35, %c0_36, %c1_37, %c0_38] : memref<1x6x6x8xf32, #tpu.memory_space<vmem>>, vector<1x4x4x8xf32>
    %17 = vector.shape_cast %16 : vector<1x4x4x8xf32> to vector<16x8xf32>
    %c0_39 = arith.constant 0 : index
    %c1_40 = arith.constant 1 : index
    %c0_41 = arith.constant 0 : index
    %c0_42 = arith.constant 0 : index
    %18 = vector.load %arg1[%c0_39, %c1_40, %c0_41, %c0_42] : memref<3x3x8x16xf32, #tpu.memory_space<vmem>>, vector<1x1x8x16xf32>
    %19 = vector.shape_cast %18 : vector<1x1x8x16xf32> to vector<8x16xf32>
    %cst_43 = arith.constant dense<0.000000e+00> : vector<16x16xf32>
    %20 = tpu.matmul %17, %19, %cst_43 {dimension_numbers = #tpu.dot_dimension_numbers<[1], [0], [0], [1], [0, 0, 1, 1], [], []>} : vector<16x8xf32>, vector<8x16xf32>, vector<16x16xf32> -> vector<16x16xf32>
    %21 = arith.addf %15, %20 : vector<16x16xf32>
    %c0_44 = arith.constant 0 : index
    %c0_45 = arith.constant 0 : index
    %c2 = arith.constant 2 : index
    %c0_46 = arith.constant 0 : index
    %22 = vector.load %arg4[%c0_44, %c0_45, %c2, %c0_46] : memref<1x6x6x8xf32, #tpu.memory_space<vmem>>, vector<1x4x4x8xf32>
    %23 = vector.shape_cast %22 : vector<1x4x4x8xf32> to vector<16x8xf32>
    %c0_47 = arith.constant 0 : index
    %c2_48 = arith.constant 2 : index
    %c0_49 = arith.constant 0 : index
    %c0_50 = arith.constant 0 : index
    %24 = vector.load %arg1[%c0_47, %c2_48, %c0_49, %c0_50] : memref<3x3x8x16xf32, #tpu.memory_space<vmem>>, vector<1x1x8x16xf32>
    %25 = vector.shape_cast %24 : vector<1x1x8x16xf32> to vector<8x16xf32>
    %cst_51 = arith.constant dense<0.000000e+00> : vector<16x16xf32>
    %26 = tpu.matmul %23, %25, %cst_51 {dimension_numbers = #tpu.dot_dimension_numbers<[1], [0], [0], [1], [0, 0, 1, 1], [], []>} : vector<16x8xf32>, vector<8x16xf32>, vector<16x16xf32> -> vector<16x16xf32>
    %27 = arith.addf %21, %26 : vector<16x16xf32>
    %c0_52 = arith.constant 0 : index
    %c1_53 = arith.constant 1 : index
    %c0_54 = arith.constant 0 : index
    %c0_55 = arith.constant 0 : index
    %28 = vector.load %arg4[%c0_52, %c1_53, %c0_54, %c0_55] : memref<1x6x6x8xf32, #tpu.memory_space<vmem>>, vector<1x4x4x8xf32>
    %29 = vector.shape_cast %28 : vector<1x4x4x8xf32> to vector<16x8xf32>
    %c1_56 = arith.constant 1 : index
    %c0_57 = arith.constant 0 : index
    %c0_58 = arith.constant 0 : index
    %c0_59 = arith.constant 0 : index
    %30 = vector.load %arg1[%c1_56, %c0_57, %c0_58, %c0_59] : memref<3x3x8x16xf32, #tpu.memory_space<vmem>>, vector<1x1x8x16xf32>
    %31 = vector.shape_cast %30 : vector<1x1x8x16xf32> to vector<8x16xf32>
    %cst_60 = arith.constant dense<0.000000e+00> : vector<16x16xf32>
    %32 = tpu.matmul %29, %31, %cst_60 {dimension_numbers = #tpu.dot_dimension_numbers<[1], [0], [0], [1], [0, 0, 1, 1], [], []>} : vector<16x8xf32>, vector<8x16xf32>, vector<16x16xf32> -> vector<16x16xf32>
    %33 = arith.addf %27, %32 : vector<16x16xf32>
    %c0_61 = arith.constant 0 : index
    %c1_62 = arith.constant 1 : index
    %c1_63 = arith.constant 1 : index
    %c0_64 = arith.constant 0 : index
    %34 = vector.load %arg4[%c0_61, %c1_62, %c1_63, %c0_64] : memref<1x6x6x8xf32, #tpu.memory_space<vmem>>, vector<1x4x4x8xf32>
    %35 = vector.shape_cast %34 : vector<1x4x4x8xf32> to vector<16x8xf32>
    %c1_65 = arith.constant 1 : index
    %c1_66 = arith.constant 1 : index
    %c0_67 = arith.constant 0 : index
    %c0_68 = arith.constant 0 : index
    %36 = vector.load %arg1[%c1_65, %c1_66, %c0_67, %c0_68] : memref<3x3x8x16xf32, #tpu.memory_space<vmem>>, vector<1x1x8x16xf32>
    %37 = vector.shape_cast %36 : vector<1x1x8x16xf32> to vector<8x16xf32>
    %cst_69 = arith.constant dense<0.000000e+00> : vector<16x16xf32>
    %38 = tpu.matmul %35, %37, %cst_69 {dimension_numbers = #tpu.dot_dimension_numbers<[1], [0], [0], [1], [0, 0, 1, 1], [], []>} : vector<16x8xf32>, vector<8x16xf32>, vector<16x16xf32> -> vector<16x16xf32>
    %39 = arith.addf %33, %38 : vector<16x16xf32>
    %c0_70 = arith.constant 0 : index
    %c1_71 = arith.constant 1 : index
    %c2_72 = arith.constant 2 : index
    %c0_73 = arith.constant 0 : index
    %40 = vector.load %arg4[%c0_70, %c1_71, %c2_72, %c0_73] : memref<1x6x6x8xf32, #tpu.memory_space<vmem>>, vector<1x4x4x8xf32>
    %41 = vector.shape_cast %40 : vector<1x4x4x8xf32> to vector<16x8xf32>
    %c1_74 = arith.constant 1 : index
    %c2_75 = arith.constant 2 : index
    %c0_76 = arith.constant 0 : index
    %c0_77 = arith.constant 0 : index
    %42 = vector.load %arg1[%c1_74, %c2_75, %c0_76, %c0_77] : memref<3x3x8x16xf32, #tpu.memory_space<vmem>>, vector<1x1x8x16xf32>
    %43 = vector.shape_cast %42 : vector<1x1x8x16xf32> to vector<8x16xf32>
    %cst_78 = arith.constant dense<0.000000e+00> : vector<16x16xf32>
    %44 = tpu.matmul %41, %43, %cst_78 {dimension_numbers = #tpu.dot_dimension_numbers<[1], [0], [0], [1], [0, 0, 1, 1], [], []>} : vector<16x8xf32>, vector<8x16xf32>, vector<16x16xf32> -> vector<16x16xf32>
    %45 = arith.addf %39, %44 : vector<16x16xf32>
    %c0_79 = arith.constant 0 : index
    %c2_80 = arith.constant 2 : index
    %c0_81 = arith.constant 0 : index
    %c0_82 = arith.constant 0 : index
    %46 = vector.load %arg4[%c0_79, %c2_80, %c0_81, %c0_82] : memref<1x6x6x8xf32, #tpu.memory_space<vmem>>, vector<1x4x4x8xf32>
    %47 = vector.shape_cast %46 : vector<1x4x4x8xf32> to vector<16x8xf32>
    %c2_83 = arith.constant 2 : index
    %c0_84 = arith.constant 0 : index
    %c0_85 = arith.constant 0 : index
    %c0_86 = arith.constant 0 : index
    %48 = vector.load %arg1[%c2_83, %c0_84, %c0_85, %c0_86] : memref<3x3x8x16xf32, #tpu.memory_space<vmem>>, vector<1x1x8x16xf32>
    %49 = vector.shape_cast %48 : vector<1x1x8x16xf32> to vector<8x16xf32>
    %cst_87 = arith.constant dense<0.000000e+00> : vector<16x16xf32>
    %50 = tpu.matmul %47, %49, %cst_87 {dimension_numbers = #tpu.dot_dimension_numbers<[1], [0], [0], [1], [0, 0, 1, 1], [], []>} : vector<16x8xf32>, vector<8x16xf32>, vector<16x16xf32> -> vector<16x16xf32>
    %51 = arith.addf %45, %50 : vector<16x16xf32>
    %c0_88 = arith.constant 0 : index
    %c2_89 = arith.constant 2 : index
    %c1_90 = arith.constant 1 : index
    %c0_91 = arith.constant 0 : index
    %52 = vector.load %arg4[%c0_88, %c2_89, %c1_90, %c0_91] : memref<1x6x6x8xf32, #tpu.memory_space<vmem>>, vector<1x4x4x8xf32>
    %53 = vector.shape_cast %52 : vector<1x4x4x8xf32> to vector<16x8xf32>
    %c2_92 = arith.constant 2 : index
    %c1_93 = arith.constant 1 : index
    %c0_94 = arith.constant 0 : index
    %c0_95 = arith.constant 0 : index
    %54 = vector.load %arg1[%c2_92, %c1_93, %c0_94, %c0_95] : memref<3x3x8x16xf32, #tpu.memory_space<vmem>>, vector<1x1x8x16xf32>
    %55 = vector.shape_cast %54 : vector<1x1x8x16xf32> to vector<8x16xf32>
    %cst_96 = arith.constant dense<0.000000e+00> : vector<16x16xf32>
    %56 = tpu.matmul %53, %55, %cst_96 {dimension_numbers = #tpu.dot_dimension_numbers<[1], [0], [0], [1], [0, 0, 1, 1], [], []>} : vector<16x8xf32>, vector<8x16xf32>, vector<16x16xf32> -> vector<16x16xf32>
    %57 = arith.addf %51, %56 : vector<16x16xf32>
    %c0_97 = arith.constant 0 : index
    %c2_98 = arith.constant 2 : index
    %c2_99 = arith.constant 2 : index
    %c0_100 = arith.constant 0 : index
    %58 = vector.load %arg4[%c0_97, %c2_98, %c2_99, %c0_100] : memref<1x6x6x8xf32, #tpu.memory_space<vmem>>, vector<1x4x4x8xf32>
    %59 = vector.shape_cast %58 : vector<1x4x4x8xf32> to vector<16x8xf32>
    %c2_101 = arith.constant 2 : index
    %c2_102 = arith.constant 2 : index
    %c0_103 = arith.constant 0 : index
    %c0_104 = arith.constant 0 : index
    %60 = vector.load %arg1[%c2_101, %c2_102, %c0_103, %c0_104] : memref<3x3x8x16xf32, #tpu.memory_space<vmem>>, vector<1x1x8x16xf32>
    %61 = vector.shape_cast %60 : vector<1x1x8x16xf32> to vector<8x16xf32>
    %cst_105 = arith.constant dense<0.000000e+00> : vector<16x16xf32>
    %62 = tpu.matmul %59, %61, %cst_105 {dimension_numbers = #tpu.dot_dimension_numbers<[1], [0], [0], [1], [0, 0, 1, 1], [], []>} : vector<16x8xf32>, vector<8x16xf32>, vector<16x16xf32> -> vector<16x16xf32>
    %63 = arith.addf %57, %62 : vector<16x16xf32>
    %64 = vector.broadcast %10 : vector<1x16xf32> to vector<16x16xf32>
    %65 = arith.addf %63, %64 : vector<16x16xf32>
    %66 = vector.shape_cast %65 : vector<16x16xf32> to vector<1x4x4x16xf32>
    %c0_106 = arith.constant 0 : index
    %c0_107 = arith.constant 0 : index
    %c0_108 = arith.constant 0 : index
    %c0_109 = arith.constant 0 : index
    %67 = vector.load %arg3[%c0_106, %c0_107, %c0_108, %c0_109] : memref<1x4x4x16xf32, #tpu.memory_space<vmem>>, vector<1x4x4x16xf32>
    tpu.vector_store %arg3[%c0_106, %c0_107, %c0_108, %c0_109], %66 {strides = array<i32>} : memref<1x4x4x16xf32, #tpu.memory_space<vmem>>, vector<1x4x4x16xf32>,
    return
  }
}

</mosaic_0001>

<llo_original>
// kernel: tpu_custom_call.1
$region0: #{tpu_custom_call.1}
  #allocation0 [shape = 'u32[]', space=smem, size = 0x4, offset = 0x4, fixed_abs, tag = 'smem constant byte address 0x4 - core index']
  #allocation1 [shape = 'u32[144,128]{1,0:T(1,128)}', space=vmem, size = 0x12000, scoped, tag = 'internal scratch']
  #allocation2 [shape = 'f32[1,6,6,8]{3,2,1,0:T(8,128)}', space=vmem, size = 0x6000, scoped, tag = 'scratch operand']
  %s0 = inlined_call_operand.hbm [shape: f32[1,4,4,8], index: 0, kind: input, shape index: {}]
  %s1 = inlined_call_operand.hbm [shape: f32[3,3,8,16], index: 1, kind: input, shape index: {}]
  %s2 = inlined_call_operand.vmem [shape: f32[1,16], index: 2, kind: input, shape index: {}]
  %s3 = inlined_call_operand.hbm [shape: f32[1,4,4,16], index: 3, kind: output, shape index: {}]
  %s4 = sld [smem:[#allocation0]]
  $region30: #{tpu_custom_call.1} parent=0
    _
  %s6 = ssub.s32 1, %s4
  %s7 = scalar_select 0, %s6, %s4
  $region1: #{tpu_custom_call.1} parent=0
    #allocation3 [shape = 'u8[8192]{0}', space=vmem, size = 0x2000, scoped, tag = 'input window, operand 0, single buffered']
    #allocation4 [shape = 's32[1]{0}', space=sflag, size = 0x4, scoped, tag = 'scoped memory for tpu_custom_call.1']
    #allocation5 [shape = 's32[1]{0}', space=sflag, size = 0x4, scoped, tag = 'scoped memory for tpu_custom_call.1']
    #allocation6 [shape = 'u8[36864]{0}', space=vmem, size = 0x9000, scoped, tag = 'input window, operand 1, single buffered']
    #allocation7 [shape = 's32[1]{0}', space=sflag, size = 0x4, scoped, tag = 'scoped memory for tpu_custom_call.1']
    #allocation8 [shape = 'u8[8192]{0}', space=vmem, size = 0x2000, scoped, tag = 'output window, operand 0, single buffered']
    %8 = vsyncpa [#allocation4], 0
    %9 = vsyncpa [#allocation7], 0
    %10 = vsyncpa [#allocation5], 0
    // Predicated region
    $region2: #{tpu_custom_call.1} parent=1 // pred_check
      _
    $region3: #{tpu_custom_call.1} parent=1 // pred_check_branch
      %12 = sbr.rel (0) target = $region5
    $region4: #{tpu_custom_call.1} parent=1 // pred_region
      %s14 = ssub.s32 256, 256
      %15 = vsyncadd [#allocation4], %s14
      %s16 = sshll.u32 [#allocation3], 4
      %s17 = int_to_ptr.vmem [resolvable:$true] %s16
      %22 = dma.hbm_to_vmem [thread:$0]  %s0, 256, %s17, [#allocation4], 64, 64, 4
    $region5: #{tpu_custom_call.1} parent=1 // pred_fallthru
      _
    // Predicated region
    $region6: #{tpu_custom_call.1} parent=1 // pred_check
      _
    $region7: #{tpu_custom_call.1} parent=1 // pred_check_branch
      %24 = sbr.rel (0) target = $region9
    $region8: #{tpu_custom_call.1} parent=1 // pred_region
      %s26 = ssub.s32 1152, 1152
      %27 = vsyncadd [#allocation7], %s26
      %s28 = sshll.u32 [#allocation6], 4
      %s29 = int_to_ptr.vmem [resolvable:$true] %s28
      %34 = dma.hbm_to_vmem [thread:$0]  %s1, 1152, %s29, [#allocation7], 128, 128, 8
    $region9: #{tpu_custom_call.1} parent=1 // pred_fallthru
      _
    // Predicated region
    $region10: #{tpu_custom_call.1} parent=1 // pred_check
      _
    $region11: #{tpu_custom_call.1} parent=1 // pred_check_branch
      %36 = sbr.rel (0) target = $region13
    $region12: #{tpu_custom_call.1} parent=1 // pred_region
      _
    $region13: #{tpu_custom_call.1} parent=1 // pred_fallthru
      _
    // Predicated region
    $region14: #{tpu_custom_call.1} parent=1 // pred_check
      _
    $region15: #{tpu_custom_call.1} parent=1 // pred_check_branch
      %38 = sbr.rel (0) target = $region17
    $region16: #{tpu_custom_call.1} parent=1 // pred_region
      %39 = dma.done [#allocation4], 256
    $region17: #{tpu_custom_call.1} parent=1 // pred_fallthru
      _
    // Predicated region
    $region18: #{tpu_custom_call.1} parent=1 // pred_check
      _
    $region19: #{tpu_custom_call.1} parent=1 // pred_check_branch
      %41 = sbr.rel (0) target = $region21
    $region20: #{tpu_custom_call.1} parent=1 // pred_region
      %42 = dma.done [#allocation7], 1152
    $region21: #{tpu_custom_call.1} parent=1 // pred_fallthru
      _
    %vm43 = vcmask 62464
    %44 = vst.msk [vmem:[#allocation2] sm:$0x3f] %vm43, 0.0
    %s45 = scalar_lea.vmem [#allocation2], 40
    %46 = vst.msk [vmem:[%s45] sm:$0x3f] %vm43, 0.0
    %vm47 = vcmask 57344
    %48 = vst.msk [vmem:[#allocation2] sm:$0x1] %vm47, 0.0
    %49 = vst.msk [vmem:[#allocation2 + $0x8] sm:$0x1] %vm47, 0.0
    %50 = vst.msk [vmem:[#allocation2 + $0x10] sm:$0x1] %vm47, 0.0
    %51 = vst.msk [vmem:[#allocation2 + $0x18] sm:$0x1] %vm47, 0.0
    %52 = vst.msk [vmem:[#allocation2 + $0x20] sm:$0x1] %vm47, 0.0
    %53 = vst.msk [vmem:[#allocation2 + $0x28] sm:$0x1] %vm47, 0.0
    %54 = vst.msk [vmem:[#allocation2 + $0x5] sm:$0x1] %vm47, 0.0
    %55 = vst.msk [vmem:[#allocation2 + $0xd] sm:$0x1] %vm47, 0.0
    %56 = vst.msk [vmem:[#allocation2 + $0x15] sm:$0x1] %vm47, 0.0
    %57 = vst.msk [vmem:[#allocation2 + $0x1d] sm:$0x1] %vm47, 0.0
    %58 = vst.msk [vmem:[#allocation2 + $0x25] sm:$0x1] %vm47, 0.0
    %59 = vst.msk [vmem:[#allocation2 + $0x2d] sm:$0x1] %vm47, 0.0
    %v60 = vld [vmem:[#allocation3] sm:$0xf]
    %v61 = vld [vmem:[#allocation3 + $0x4] sm:$0xf]
    %v62 = vld [vmem:[#allocation3 + $0x8] sm:$0xf]
    %v63 = vld [vmem:[#allocation3 + $0xc] sm:$0xf]
    %s64 = scalar_lea.vmem [#allocation2], 8
    %vm65 = vcmask 60416
    %66 = vst.msk [vmem:[%s64 + $0x1] sm:$0xf] %vm65, %v60
    %67 = vst.msk [vmem:[%s64 + $0x9] sm:$0xf] %vm65, %v61
    %68 = vst.msk [vmem:[%s64 + $0x11] sm:$0xf] %vm65, %v62
    %69 = vst.msk [vmem:[%s64 + $0x19] sm:$0xf] %vm65, %v63
    %v70 = vld [vmem:[%s2] sm:$0x1]
    %v71 = vld [vmem:[#allocation2] sm:$0xf]
    %v72 = vld [vmem:[#allocation2 + $0x8] sm:$0xf]
    %v73 = vld [vmem:[#allocation2 + $0x10] sm:$0xf]
    %v74 = vld [vmem:[#allocation2 + $0x18] sm:$0xf]
    %v75 = vld [vmem:[#allocation6] sm:$0xff]
    %v76 = vld [vmem:[#allocation2 + $0x1] sm:$0xf]
    %v77 = vld [vmem:[#allocation2 + $0x9] sm:$0xf]
    %v78 = vld [vmem:[#allocation2 + $0x11] sm:$0xf]
    %v79 = vld [vmem:[#allocation2 + $0x19] sm:$0xf]
    %s80 = scalar_lea.vmem [#allocation6], 8
    %v81 = vld [vmem:[%s80] sm:$0xff]
    %v86 = vcombine.low %v76, %v77
    %v87 = vcombine.low %v78, %v79
    %vm88 = vcmask 64512
    %v89 = vsel %vm88, %v86, 0
    %v91 = vsel %vm88, %v87, 0
    %93 = vmatprep.subr.mxu0 0.0
    %94 = vmatpush1.msra.mxu0 %v81
    %95 = vmatprep.subr.mxu0 0.0
    %96 = vmatpush1.msra.mxu0 0.0
    %97 = vmatprep.subr.mxu0 0.0
    %98 = vmatpush1.msra.mxu0 0.0
    %99 = vmatprep.subr.mxu0 0.0
    %100 = vmatpush1.msra.mxu0 0.0
    %101 = vmatprep.subr.mxu0 0.0
    %102 = vmatpush1.msra.mxu0 0.0
    %103 = vmatprep.subr.mxu0 0.0
    %104 = vmatpush1.msra.mxu0 0.0
    %105 = vmatprep.subr.mxu0 0.0
    %106 = vmatpush1.msra.mxu0 0.0
    %107 = vmatprep.subr.mxu0 0.0
    %108 = vmatpush1.msra.mxu0 0.0
    %109 = vmatprep.subr.mxu0 0.0
    %110 = vmatpush1.msra.mxu0 0.0
    %111 = vmatprep.subr.mxu0 0.0
    %112 = vmatpush1.msra.mxu0 0.0
    %113 = vmatprep.subr.mxu0 0.0
    %114 = vmatpush1.msra.mxu0 0.0
    %115 = vmatprep.subr.mxu0 0.0
    %116 = vmatpush1.msra.mxu0 0.0
    %117 = vmatprep.subr.mxu0 0.0
    %118 = vmatpush1.msra.mxu0 0.0
    %119 = vmatprep.subr.mxu0 0.0
    %120 = vmatpush1.msra.mxu0 0.0
    %121 = vmatprep.subr.mxu0 0.0
    %122 = vmatpush1.msra.mxu0 0.0
    %123 = vmatprep.subr.mxu0 0.0
    %124 = vmatpush1.msra.mxu0 0.0
    %125 = vmatprep.subr.mxu0 0.0
    %126 = vmatpush1.msra.mxu0 0.0
    %127 = vmatprep.subr.mxu0 0.0
    %128 = vmatpush1.msra.mxu0 0.0
    %129 = vmatprep.subr.mxu0 0.0
    %130 = vmatpush1.msra.mxu0 0.0
    %131 = vmatprep.subr.mxu0 0.0
    %132 = vmatpush1.msra.mxu0 0.0
    %133 = vmatprep.subr.mxu0 0.0
    %134 = vmatpush1.msra.mxu0 0.0
    %135 = vmatprep.subr.mxu0 0.0
    %136 = vmatpush1.msra.mxu0 0.0
    %137 = vmatprep.subr.mxu0 0.0
    %138 = vmatpush1.msra.mxu0 0.0
    %139 = vmatprep.subr.mxu0 0.0
    %140 = vmatpush1.msra.mxu0 0.0
    %141 = vmatprep.subr.mxu0 0.0
    %142 = vmatpush1.msra.mxu0 0.0
    %143 = vmatprep.subr.mxu0 0.0
    %144 = vmatpush1.msra.mxu0 0.0
    %145 = vmatprep.subr.mxu0 0.0
    %146 = vmatpush1.msra.mxu0 0.0
    %147 = vmatprep.subr.mxu0 0.0
    %148 = vmatpush1.msra.mxu0 0.0
    %149 = vmatprep.subr.mxu0 0.0
    %150 = vmatpush1.msra.mxu0 0.0
    %151 = vmatprep.subr.mxu0 0.0
    %152 = vmatpush1.msra.mxu0 0.0
    %153 = vmatprep.subr.mxu0 0.0
    %154 = vmatpush1.msra.mxu0 0.0
    %155 = vmatprep.subr.mxu0 0.0
    %156 = vmatpush1.msra.mxu0 0.0
    %157 = vmatprep.mubr.f32.mxu0 0.0
    %158 = vmatmul.mubr.f32.gmra.mrb[0].mxu0 %v89
    %v159 = vpop.f32.mrb[0].mxu0
    %v160 = vadd.f32 0.0, %v159
    %v161 = vpop.f32.mrb[0].mxu0
    %162 = vmatprep.mubr.f32.mxu0 0.0
    %163 = vmatmul.mubr.f32.gmra.mrb[0].mxu0 %v91
    %v164 = vpop.f32.mrb[0].mxu0
    %v165 = vadd.f32 0.0, %v164
    %v166 = vpop.f32.mrb[0].mxu0
    %167 = vdwg.mxu0
    %v172 = vcombine.low %v71, %v72
    %v173 = vcombine.low %v73, %v74
    %v174 = vsel %vm88, %v172, 0
    %v176 = vsel %vm88, %v173, 0
    %178 = vmatprep.subr.mxu0 0.0
    %179 = vmatpush1.msra.mxu0 %v75
    %180 = vmatprep.subr.mxu0 0.0
    %181 = vmatpush1.msra.mxu0 0.0
    %182 = vmatprep.subr.mxu0 0.0
    %183 = vmatpush1.msra.mxu0 0.0
    %184 = vmatprep.subr.mxu0 0.0
    %185 = vmatpush1.msra.mxu0 0.0
    %186 = vmatprep.subr.mxu0 0.0
    %187 = vmatpush1.msra.mxu0 0.0
    %188 = vmatprep.subr.mxu0 0.0
    %189 = vmatpush1.msra.mxu0 0.0
    %190 = vmatprep.subr.mxu0 0.0
    %191 = vmatpush1.msra.mxu0 0.0
    %192 = vmatprep.subr.mxu0 0.0
    %193 = vmatpush1.msra.mxu0 0.0
    %194 = vmatprep.subr.mxu0 0.0
    %195 = vmatpush1.msra.mxu0 0.0
    %196 = vmatprep.subr.mxu0 0.0
    %197 = vmatpush1.msra.mxu0 0.0
    %198 = vmatprep.subr.mxu0 0.0
    %199 = vmatpush1.msra.mxu0 0.0
    %200 = vmatprep.subr.mxu0 0.0
    %201 = vmatpush1.msra.mxu0 0.0
    %202 = vmatprep.subr.mxu0 0.0
    %203 = vmatpush1.msra.mxu0 0.0
    %204 = vmatprep.subr.mxu0 0.0
    %205 = vmatpush1.msra.mxu0 0.0
    %206 = vmatprep.subr.mxu0 0.0
    %207 = vmatpush1.msra.mxu0 0.0
    %208 = vmatprep.subr.mxu0 0.0
    %209 = vmatpush1.msra.mxu0 0.0
    %210 = vmatprep.subr.mxu0 0.0
    %211 = vmatpush1.msra.mxu0 0.0
    %212 = vmatprep.subr.mxu0 0.0
    %213 = vmatpush1.msra.mxu0 0.0
    %214 = vmatprep.subr.mxu0 0.0
    %215 = vmatpush1.msra.mxu0 0.0
    %216 = vmatprep.subr.mxu0 0.0
    %217 = vmatpush1.msra.mxu0 0.0
    %218 = vmatprep.subr.mxu0 0.0
    %219 = vmatpush1.msra.mxu0 0.0
    %220 = vmatprep.subr.mxu0 0.0
    %221 = vmatpush1.msra.mxu0 0.0
    %222 = vmatprep.subr.mxu0 0.0
    %223 = vmatpush1.msra.mxu0 0.0
    %224 = vmatprep.subr.mxu0 0.0
    %225 = vmatpush1.msra.mxu0 0.0
    %226 = vmatprep.subr.mxu0 0.0
    %227 = vmatpush1.msra.mxu0 0.0
    %228 = vmatprep.subr.mxu0 0.0
    %229 = vmatpush1.msra.mxu0 0.0
    %230 = vmatprep.subr.mxu0 0.0
    %231 = vmatpush1.msra.mxu0 0.0
    %232 = vmatprep.subr.mxu0 0.0
    %233 = vmatpush1.msra.mxu0 0.0
    %234 = vmatprep.subr.mxu0 0.0
    %235 = vmatpush1.msra.mxu0 0.0
    %236 = vmatprep.subr.mxu0 0.0
    %237 = vmatpush1.msra.mxu0 0.0
    %238 = vmatprep.subr.mxu0 0.0
    %239 = vmatpush1.msra.mxu0 0.0
    %240 = vmatprep.subr.mxu0 0.0
    %241 = vmatpush1.msra.mxu0 0.0
    %242 = vmatprep.mubr.f32.mxu0 0.0
    %243 = vmatmul.mubr.f32.gmra.mrb[0].mxu0 %v174
    %v244 = vpop.f32.mrb[0].mxu0
    %v245 = vadd.f32 %v160, %v244
    %v246 = vpop.f32.mrb[0].mxu0
    %247 = vmatprep.mubr.f32.mxu0 0.0
    %248 = vmatmul.mubr.f32.gmra.mrb[0].mxu0 %v176
    %v249 = vpop.f32.mrb[0].mxu0
    %v250 = vadd.f32 %v165, %v249
    %v251 = vpop.f32.mrb[0].mxu0
    %252 = vdwg.mxu0
    %v253 = vld [vmem:[#allocation2 + $0x2] sm:$0xf]
    %v254 = vld [vmem:[#allocation2 + $0xa] sm:$0xf]
    %v255 = vld [vmem:[#allocation2 + $0x12] sm:$0xf]
    %v256 = vld [vmem:[#allocation2 + $0x1a] sm:$0xf]
    %s257 = scalar_lea.vmem [#allocation6], 16
    %v258 = vld [vmem:[%s257] sm:$0xff]
    %v263 = vcombine.low %v253, %v254
    %v264 = vcombine.low %v255, %v256
    %v265 = vsel %vm88, %v263, 0
    %v267 = vsel %vm88, %v264, 0
    %269 = vmatprep.subr.mxu0 0.0
    %270 = vmatpush1.msra.mxu0 %v258
    %271 = vmatprep.subr.mxu0 0.0
    %272 = vmatpush1.msra.mxu0 0.0
    %273 = vmatprep.subr.mxu0 0.0
    %274 = vmatpush1.msra.mxu0 0.0
    %275 = vmatprep.subr.mxu0 0.0
    %276 = vmatpush1.msra.mxu0 0.0
    %277 = vmatprep.subr.mxu0 0.0
    %278 = vmatpush1.msra.mxu0 0.0
    %279 = vmatprep.subr.mxu0 0.0
    %280 = vmatpush1.msra.mxu0 0.0
    %281 = vmatprep.subr.mxu0 0.0
    %282 = vmatpush1.msra.mxu0 0.0
    %283 = vmatprep.subr.mxu0 0.0
    %284 = vmatpush1.msra.mxu0 0.0
    %285 = vmatprep.subr.mxu0 0.0
    %286 = vmatpush1.msra.mxu0 0.0
    %287 = vmatprep.subr.mxu0 0.0
    %288 = vmatpush1.msra.mxu0 0.0
    %289 = vmatprep.subr.mxu0 0.0
    %290 = vmatpush1.msra.mxu0 0.0
    %291 = vmatprep.subr.mxu0 0.0
    %292 = vmatpush1.msra.mxu0 0.0
    %293 = vmatprep.subr.mxu0 0.0
    %294 = vmatpush1.msra.mxu0 0.0
    %295 = vmatprep.subr.mxu0 0.0
    %296 = vmatpush1.msra.mxu0 0.0
    %297 = vmatprep.subr.mxu0 0.0
    %298 = vmatpush1.msra.mxu0 0.0
    %299 = vmatprep.subr.mxu0 0.0
    %300 = vmatpush1.msra.mxu0 0.0
    %301 = vmatprep.subr.mxu0 0.0
    %302 = vmatpush1.msra.mxu0 0.0
    %303 = vmatprep.subr.mxu0 0.0
    %304 = vmatpush1.msra.mxu0 0.0
    %305 = vmatprep.subr.mxu0 0.0
    %306 = vmatpush1.msra.mxu0 0.0
    %307 = vmatprep.subr.mxu0 0.0
    %308 = vmatpush1.msra.mxu0 0.0
    %309 = vmatprep.subr.mxu0 0.0
    %310 = vmatpush1.msra.mxu0 0.0
    %311 = vmatprep.subr.mxu0 0.0
    %312 = vmatpush1.msra.mxu0 0.0
    %313 = vmatprep.subr.mxu0 0.0
    %314 = vmatpush1.msra.mxu0 0.0
    %315 = vmatprep.subr.mxu0 0.0
    %316 = vmatpush1.msra.mxu0 0.0
    %317 = vmatprep.subr.mxu0 0.0
    %318 = vmatpush1.msra.mxu0 0.0
    %319 = vmatprep.subr.mxu0 0.0
    %320 = vmatpush1.msra.mxu0 0.0
    %321 = vmatprep.subr.mxu0 0.0
    %322 = vmatpush1.msra.mxu0 0.0
    %323 = vmatprep.subr.mxu0 0.0
    %324 = vmatpush1.msra.mxu0 0.0
    %325 = vmatprep.subr.mxu0 0.0
    %326 = vmatpush1.msra.mxu0 0.0
    %327 = vmatprep.subr.mxu0 0.0
    %328 = vmatpush1.msra.mxu0 0.0
    %329 = vmatprep.subr.mxu0 0.0
    %330 = vmatpush1.msra.mxu0 0.0
    %331 = vmatprep.subr.mxu0 0.0
    %332 = vmatpush1.msra.mxu0 0.0
    %333 = vmatprep.mubr.f32.mxu0 0.0
    %334 = vmatmul.mubr.f32.gmra.mrb[0].mxu0 %v265
    %v335 = vpop.f32.mrb[0].mxu0
    %v336 = vadd.f32 0.0, %v335
    %v337 = vpop.f32.mrb[0].mxu0
    %338 = vmatprep.mubr.f32.mxu0 0.0
    %339 = vmatmul.mubr.f32.gmra.mrb[0].mxu0 %v267
    %v340 = vpop.f32.mrb[0].mxu0
    %v341 = vadd.f32 0.0, %v340
    %v342 = vpop.f32.mrb[0].mxu0
    %343 = vdwg.mxu0
    %v344 = vadd.f32 %v245, %v336
    %v345 = vadd.f32 %v250, %v341
    %v346 = vld [vmem:[%s64] sm:$0xf]
    %v347 = vld [vmem:[%s64 + $0x8] sm:$0xf]
    %v348 = vld [vmem:[%s64 + $0x10] sm:$0xf]
    %v349 = vld [vmem:[%s64 + $0x18] sm:$0xf]
    %s350 = scalar_lea.vmem [#allocation6], 24
    %v351 = vld [vmem:[%s350] sm:$0xff]
    %v356 = vcombine.low %v346, %v347
    %v357 = vcombine.low %v348, %v349
    %v358 = vsel %vm88, %v356, 0
    %v360 = vsel %vm88, %v357, 0
    %362 = vmatprep.subr.mxu0 0.0
    %363 = vmatpush1.msra.mxu0 %v351
    %364 = vmatprep.subr.mxu0 0.0
    %365 = vmatpush1.msra.mxu0 0.0
    %366 = vmatprep.subr.mxu0 0.0
    %367 = vmatpush1.msra.mxu0 0.0
    %368 = vmatprep.subr.mxu0 0.0
    %369 = vmatpush1.msra.mxu0 0.0
    %370 = vmatprep.subr.mxu0 0.0
    %371 = vmatpush1.msra.mxu0 0.0
    %372 = vmatprep.subr.mxu0 0.0
    %373 = vmatpush1.msra.mxu0 0.0
    %374 = vmatprep.subr.mxu0 0.0
    %375 = vmatpush1.msra.mxu0 0.0
    %376 = vmatprep.subr.mxu0 0.0
    %377 = vmatpush1.msra.mxu0 0.0
    %378 = vmatprep.subr.mxu0 0.0
    %379 = vmatpush1.msra.mxu0 0.0
    %380 = vmatprep.subr.mxu0 0.0
    %381 = vmatpush1.msra.mxu0 0.0
    %382 = vmatprep.subr.mxu0 0.0
    %383 = vmatpush1.msra.mxu0 0.0
    %384 = vmatprep.subr.mxu0 0.0
    %385 = vmatpush1.msra.mxu0 0.0
    %386 = vmatprep.subr.mxu0 0.0
    %387 = vmatpush1.msra.mxu0 0.0
    %388 = vmatprep.subr.mxu0 0.0
    %389 = vmatpush1.msra.mxu0 0.0
    %390 = vmatprep.subr.mxu0 0.0
    %391 = vmatpush1.msra.mxu0 0.0
    %392 = vmatprep.subr.mxu0 0.0
    %393 = vmatpush1.msra.mxu0 0.0
    %394 = vmatprep.subr.mxu0 0.0
    %395 = vmatpush1.msra.mxu0 0.0
    %396 = vmatprep.subr.mxu0 0.0
    %397 = vmatpush1.msra.mxu0 0.0
    %398 = vmatprep.subr.mxu0 0.0
    %399 = vmatpush1.msra.mxu0 0.0
    %400 = vmatprep.subr.mxu0 0.0
    %401 = vmatpush1.msra.mxu0 0.0
    %402 = vmatprep.subr.mxu0 0.0
    %403 = vmatpush1.msra.mxu0 0.0
    %404 = vmatprep.subr.mxu0 0.0
    %405 = vmatpush1.msra.mxu0 0.0
    %406 = vmatprep.subr.mxu0 0.0
    %407 = vmatpush1.msra.mxu0 0.0
    %408 = vmatprep.subr.mxu0 0.0
    %409 = vmatpush1.msra.mxu0 0.0
    %410 = vmatprep.subr.mxu0 0.0
    %411 = vmatpush1.msra.mxu0 0.0
    %412 = vmatprep.subr.mxu0 0.0
    %413 = vmatpush1.msra.mxu0 0.0
    %414 = vmatprep.subr.mxu0 0.0
    %415 = vmatpush1.msra.mxu0 0.0
    %416 = vmatprep.subr.mxu0 0.0
    %417 = vmatpush1.msra.mxu0 0.0
    %418 = vmatprep.subr.mxu0 0.0
    %419 = vmatpush1.msra.mxu0 0.0
    %420 = vmatprep.subr.mxu0 0.0
    %421 = vmatpush1.msra.mxu0 0.0
    %422 = vmatprep.subr.mxu0 0.0
    %423 = vmatpush1.msra.mxu0 0.0
    %424 = vmatprep.subr.mxu0 0.0
    %425 = vmatpush1.msra.mxu0 0.0
    %426 = vmatprep.mubr.f32.mxu0 0.0
    %427 = vmatmul.mubr.f32.gmra.mrb[0].mxu0 %v358
    %v428 = vpop.f32.mrb[0].mxu0
    %v429 = vadd.f32 0.0, %v428
    %v430 = vpop.f32.mrb[0].mxu0
    %431 = vmatprep.mubr.f32.mxu0 0.0
    %432 = vmatmul.mubr.f32.gmra.mrb[0].mxu0 %v360
    %v433 = vpop.f32.mrb[0].mxu0
    %v434 = vadd.f32 0.0, %v433
    %v435 = vpop.f32.mrb[0].mxu0
    %436 = vdwg.mxu0
    %v437 = vadd.f32 %v344, %v429
    %v438 = vadd.f32 %v345, %v434
    %v439 = vld [vmem:[%s64 + $0x1] sm:$0xf]
    %v440 = vld [vmem:[%s64 + $0x9] sm:$0xf]
    %v441 = vld [vmem:[%s64 + $0x11] sm:$0xf]
    %v442 = vld [vmem:[%s64 + $0x19] sm:$0xf]
    %s443 = scalar_lea.vmem [#allocation6], 32
    %v444 = vld [vmem:[%s443] sm:$0xff]
    %v449 = vcombine.low %v439, %v440
    %v450 = vcombine.low %v441, %v442
    %v451 = vsel %vm88, %v449, 0
    %v453 = vsel %vm88, %v450, 0
    %455 = vmatprep.subr.mxu0 0.0
    %456 = vmatpush1.msra.mxu0 %v444
    %457 = vmatprep.subr.mxu0 0.0
    %458 = vmatpush1.msra.mxu0 0.0
    %459 = vmatprep.subr.mxu0 0.0
    %460 = vmatpush1.msra.mxu0 0.0
    %461 = vmatprep.subr.mxu0 0.0
    %462 = vmatpush1.msra.mxu0 0.0
    %463 = vmatprep.subr.mxu0 0.0
    %464 = vmatpush1.msra.mxu0 0.0
    %465 = vmatprep.subr.mxu0 0.0
    %466 = vmatpush1.msra.mxu0 0.0
    %467 = vmatprep.subr.mxu0 0.0
    %468 = vmatpush1.msra.mxu0 0.0
    %469 = vmatprep.subr.mxu0 0.0
    %470 = vmatpush1.msra.mxu0 0.0
    %471 = vmatprep.subr.mxu0 0.0
    %472 = vmatpush1.msra.mxu0 0.0
    %473 = vmatprep.subr.mxu0 0.0
    %474 = vmatpush1.msra.mxu0 0.0
    %475 = vmatprep.subr.mxu0 0.0
    %476 = vmatpush1.msra.mxu0 0.0
    %477 = vmatprep.subr.mxu0 0.0
    %478 = vmatpush1.msra.mxu0 0.0
    %479 = vmatprep.subr.mxu0 0.0
    %480 = vmatpush1.msra.mxu0 0.0
    %481 = vmatprep.subr.mxu0 0.0
    %482 = vmatpush1.msra.mxu0 0.0
    %483 = vmatprep.subr.mxu0 0.0
    %484 = vmatpush1.msra.mxu0 0.0
    %485 = vmatprep.subr.mxu0 0.0
    %486 = vmatpush1.msra.mxu0 0.0
    %487 = vmatprep.subr.mxu0 0.0
    %488 = vmatpush1.msra.mxu0 0.0
    %489 = vmatprep.subr.mxu0 0.0
    %490 = vmatpush1.msra.mxu0 0.0
    %491 = vmatprep.subr.mxu0 0.0
    %492 = vmatpush1.msra.mxu0 0.0
    %493 = vmatprep.subr.mxu0 0.0
    %494 = vmatpush1.msra.mxu0 0.0
    %495 = vmatprep.subr.mxu0 0.0
    %496 = vmatpush1.msra.mxu0 0.0
    %497 = vmatprep.subr.mxu0 0.0
    %498 = vmatpush1.msra.mxu0 0.0
    %499 = vmatprep.subr.mxu0 0.0
    %500 = vmatpush1.msra.mxu0 0.0
    %501 = vmatprep.subr.mxu0 0.0
    %502 = vmatpush1.msra.mxu0 0.0
    %503 = vmatprep.subr.mxu0 0.0
    %504 = vmatpush1.msra.mxu0 0.0
    %505 = vmatprep.subr.mxu0 0.0
    %506 = vmatpush1.msra.mxu0 0.0
    %507 = vmatprep.subr.mxu0 0.0
    %508 = vmatpush1.msra.mxu0 0.0
    %509 = vmatprep.subr.mxu0 0.0
    %510 = vmatpush1.msra.mxu0 0.0
    %511 = vmatprep.subr.mxu0 0.0
    %512 = vmatpush1.msra.mxu0 0.0
    %513 = vmatprep.subr.mxu0 0.0
    %514 = vmatpush1.msra.mxu0 0.0
    %515 = vmatprep.subr.mxu0 0.0
    %516 = vmatpush1.msra.mxu0 0.0
    %517 = vmatprep.subr.mxu0 0.0
    %518 = vmatpush1.msra.mxu0 0.0
    %519 = vmatprep.mubr.f32.mxu0 0.0
    %520 = vmatmul.mubr.f32.gmra.mrb[0].mxu0 %v451
    %v521 = vpop.f32.mrb[0].mxu0
    %v522 = vadd.f32 0.0, %v521
    %v523 = vpop.f32.mrb[0].mxu0
    %524 = vmatprep.mubr.f32.mxu0 0.0
    %525 = vmatmul.mubr.f32.gmra.mrb[0].mxu0 %v453
    %v526 = vpop.f32.mrb[0].mxu0
    %v527 = vadd.f32 0.0, %v526
    %v528 = vpop.f32.mrb[0].mxu0
    %529 = vdwg.mxu0
    %v530 = vadd.f32 %v437, %v522
    %v531 = vadd.f32 %v438, %v527
    %v532 = vld [vmem:[%s64 + $0x2] sm:$0xf]
    %v533 = vld [vmem:[%s64 + $0xa] sm:$0xf]
    %v534 = vld [vmem:[%s64 + $0x12] sm:$0xf]
    %v535 = vld [vmem:[%s64 + $0x1a] sm:$0xf]
    %s536 = scalar_lea.vmem [#allocation6], 40
    %v537 = vld [vmem:[%s536] sm:$0xff]
    %v542 = vcombine.low %v532, %v533
    %v543 = vcombine.low %v534, %v535
    %v544 = vsel %vm88, %v542, 0
    %v546 = vsel %vm88, %v543, 0
    %548 = vmatprep.subr.mxu0 0.0
    %549 = vmatpush1.msra.mxu0 %v537
    %550 = vmatprep.subr.mxu0 0.0
    %551 = vmatpush1.msra.mxu0 0.0
    %552 = vmatprep.subr.mxu0 0.0
    %553 = vmatpush1.msra.mxu0 0.0
    %554 = vmatprep.subr.mxu0 0.0
    %555 = vmatpush1.msra.mxu0 0.0
    %556 = vmatprep.subr.mxu0 0.0
    %557 = vmatpush1.msra.mxu0 0.0
    %558 = vmatprep.subr.mxu0 0.0
    %559 = vmatpush1.msra.mxu0 0.0
    %560 = vmatprep.subr.mxu0 0.0
    %561 = vmatpush1.msra.mxu0 0.0
    %562 = vmatprep.subr.mxu0 0.0
    %563 = vmatpush1.msra.mxu0 0.0
    %564 = vmatprep.subr.mxu0 0.0
    %565 = vmatpush1.msra.mxu0 0.0
    %566 = vmatprep.subr.mxu0 0.0
    %567 = vmatpush1.msra.mxu0 0.0
    %568 = vmatprep.subr.mxu0 0.0
    %569 = vmatpush1.msra.mxu0 0.0
    %570 = vmatprep.subr.mxu0 0.0
    %571 = vmatpush1.msra.mxu0 0.0
    %572 = vmatprep.subr.mxu0 0.0
    %573 = vmatpush1.msra.mxu0 0.0
    %574 = vmatprep.subr.mxu0 0.0
    %575 = vmatpush1.msra.mxu0 0.0
    %576 = vmatprep.subr.mxu0 0.0
    %577 = vmatpush1.msra.mxu0 0.0
    %578 = vmatprep.subr.mxu0 0.0
    %579 = vmatpush1.msra.mxu0 0.0
    %580 = vmatprep.subr.mxu0 0.0
    %581 = vmatpush1.msra.mxu0 0.0
    %582 = vmatprep.subr.mxu0 0.0
    %583 = vmatpush1.msra.mxu0 0.0
    %584 = vmatprep.subr.mxu0 0.0
    %585 = vmatpush1.msra.mxu0 0.0
    %586 = vmatprep.subr.mxu0 0.0
    %587 = vmatpush1.msra.mxu0 0.0
    %588 = vmatprep.subr.mxu0 0.0
    %589 = vmatpush1.msra.mxu0 0.0
    %590 = vmatprep.subr.mxu0 0.0
    %591 = vmatpush1.msra.mxu0 0.0
    %592 = vmatprep.subr.mxu0 0.0
    %593 = vmatpush1.msra.mxu0 0.0
    %594 = vmatprep.subr.mxu0 0.0
    %595 = vmatpush1.msra.mxu0 0.0
    %596 = vmatprep.subr.mxu0 0.0
    %597 = vmatpush1.msra.mxu0 0.0
    %598 = vmatprep.subr.mxu0 0.0
    %599 = vmatpush1.msra.mxu0 0.0
    %600 = vmatprep.subr.mxu0 0.0
    %601 = vmatpush1.msra.mxu0 0.0
    %602 = vmatprep.subr.mxu0 0.0
    %603 = vmatpush1.msra.mxu0 0.0
    %604 = vmatprep.subr.mxu0 0.0
    %605 = vmatpush1.msra.mxu0 0.0
    %606 = vmatprep.subr.mxu0 0.0
    %607 = vmatpush1.msra.mxu0 0.0
    %608 = vmatprep.subr.mxu0 0.0
    %609 = vmatpush1.msra.mxu0 0.0
    %610 = vmatprep.subr.mxu0 0.0
    %611 = vmatpush1.msra.mxu0 0.0
    %612 = vmatprep.mubr.f32.mxu0 0.0
    %613 = vmatmul.mubr.f32.gmra.mrb[0].mxu0 %v544
    %v614 = vpop.f32.mrb[0].mxu0
    %v615 = vadd.f32 0.0, %v614
    %v616 = vpop.f32.mrb[0].mxu0
    %617 = vmatprep.mubr.f32.mxu0 0.0
    %618 = vmatmul.mubr.f32.gmra.mrb[0].mxu0 %v546
    %v619 = vpop.f32.mrb[0].mxu0
    %v620 = vadd.f32 0.0, %v619
    %v621 = vpop.f32.mrb[0].mxu0
    %622 = vdwg.mxu0
    %v623 = vadd.f32 %v530, %v615
    %v624 = vadd.f32 %v531, %v620
    %s625 = scalar_lea.vmem [#allocation2], 16
    %v626 = vld [vmem:[%s625] sm:$0xf]
    %v627 = vld [vmem:[%s625 + $0x8] sm:$0xf]
    %v628 = vld [vmem:[%s625 + $0x10] sm:$0xf]
    %v629 = vld [vmem:[%s625 + $0x18] sm:$0xf]
    %s630 = scalar_lea.vmem [#allocation6], 48
    %v631 = vld [vmem:[%s630] sm:$0xff]
    %v636 = vcombine.low %v626, %v627
    %v637 = vcombine.low %v628, %v629
    %v638 = vsel %vm88, %v636, 0
    %v640 = vsel %vm88, %v637, 0
    %642 = vmatprep.subr.mxu0 0.0
    %643 = vmatpush1.msra.mxu0 %v631
    %644 = vmatprep.subr.mxu0 0.0
    %645 = vmatpush1.msra.mxu0 0.0
    %646 = vmatprep.subr.mxu0 0.0
    %647 = vmatpush1.msra.mxu0 0.0
    %648 = vmatprep.subr.mxu0 0.0
    %649 = vmatpush1.msra.mxu0 0.0
    %650 = vmatprep.subr.mxu0 0.0
    %651 = vmatpush1.msra.mxu0 0.0
    %652 = vmatprep.subr.mxu0 0.0
    %653 = vmatpush1.msra.mxu0 0.0
    %654 = vmatprep.subr.mxu0 0.0
    %655 = vmatpush1.msra.mxu0 0.0
    %656 = vmatprep.subr.mxu0 0.0
    %657 = vmatpush1.msra.mxu0 0.0
    %658 = vmatprep.subr.mxu0 0.0
    %659 = vmatpush1.msra.mxu0 0.0
    %660 = vmatprep.subr.mxu0 0.0
    %661 = vmatpush1.msra.mxu0 0.0
    %662 = vmatprep.subr.mxu0 0.0
    %663 = vmatpush1.msra.mxu0 0.0
    %664 = vmatprep.subr.mxu0 0.0
    %665 = vmatpush1.msra.mxu0 0.0
    %666 = vmatprep.subr.mxu0 0.0
    %667 = vmatpush1.msra.mxu0 0.0
    %668 = vmatprep.subr.mxu0 0.0
    %669 = vmatpush1.msra.mxu0 0.0
    %670 = vmatprep.subr.mxu0 0.0
    %671 = vmatpush1.msra.mxu0 0.0
    %672 = vmatprep.subr.mxu0 0.0
    %673 = vmatpush1.msra.mxu0 0.0
    %674 = vmatprep.subr.mxu0 0.0
    %675 = vmatpush1.msra.mxu0 0.0
    %676 = vmatprep.subr.mxu0 0.0
    %677 = vmatpush1.msra.mxu0 0.0
    %678 = vmatprep.subr.mxu0 0.0
    %679 = vmatpush1.msra.mxu0 0.0
    %680 = vmatprep.subr.mxu0 0.0
    %681 = vmatpush1.msra.mxu0 0.0
    %682 = vmatprep.subr.mxu0 0.0
    %683 = vmatpush1.msra.mxu0 0.0
    %684 = vmatprep.subr.mxu0 0.0
    %685 = vmatpush1.msra.mxu0 0.0
    %686 = vmatprep.subr.mxu0 0.0
    %687 = vmatpush1.msra.mxu0 0.0
    %688 = vmatprep.subr.mxu0 0.0
    %689 = vmatpush1.msra.mxu0 0.0
    %690 = vmatprep.subr.mxu0 0.0
    %691 = vmatpush1.msra.mxu0 0.0
    %692 = vmatprep.subr.mxu0 0.0
    %693 = vmatpush1.msra.mxu0 0.0
    %694 = vmatprep.subr.mxu0 0.0
    %695 = vmatpush1.msra.mxu0 0.0
    %696 = vmatprep.subr.mxu0 0.0
    %697 = vmatpush1.msra.mxu0 0.0
    %698 = vmatprep.subr.mxu0 0.0
    %699 = vmatpush1.msra.mxu0 0.0
    %700 = vmatprep.subr.mxu0 0.0
    %701 = vmatpush1.msra.mxu0 0.0
    %702 = vmatprep.subr.mxu0 0.0
    %703 = vmatpush1.msra.mxu0 0.0
    %704 = vmatprep.subr.mxu0 0.0
    %705 = vmatpush1.msra.mxu0 0.0
    %706 = vmatprep.mubr.f32.mxu0 0.0
    %707 = vmatmul.mubr.f32.gmra.mrb[0].mxu0 %v638
    %v708 = vpop.f32.mrb[0].mxu0
    %v709 = vadd.f32 0.0, %v708
    %v710 = vpop.f32.mrb[0].mxu0
    %711 = vmatprep.mubr.f32.mxu0 0.0
    %712 = vmatmul.mubr.f32.gmra.mrb[0].mxu0 %v640
    %v713 = vpop.f32.mrb[0].mxu0
    %v714 = vadd.f32 0.0, %v713
    %v715 = vpop.f32.mrb[0].mxu0
    %716 = vdwg.mxu0
    %v717 = vadd.f32 %v623, %v709
    %v718 = vadd.f32 %v624, %v714
    %v719 = vld [vmem:[%s625 + $0x1] sm:$0xf]
    %v720 = vld [vmem:[%s625 + $0x9] sm:$0xf]
    %v721 = vld [vmem:[%s625 + $0x11] sm:$0xf]
    %v722 = vld [vmem:[%s625 + $0x19] sm:$0xf]
    %s723 = scalar_lea.vmem [#allocation6], 56
    %v724 = vld [vmem:[%s723] sm:$0xff]
    %v729 = vcombine.low %v719, %v720
    %v730 = vcombine.low %v721, %v722
    %v731 = vsel %vm88, %v729, 0
    %v733 = vsel %vm88, %v730, 0
    %735 = vmatprep.subr.mxu0 0.0
    %736 = vmatpush1.msra.mxu0 %v724
    %737 = vmatprep.subr.mxu0 0.0
    %738 = vmatpush1.msra.mxu0 0.0
    %739 = vmatprep.subr.mxu0 0.0
    %740 = vmatpush1.msra.mxu0 0.0
    %741 = vmatprep.subr.mxu0 0.0
    %742 = vmatpush1.msra.mxu0 0.0
    %743 = vmatprep.subr.mxu0 0.0
    %744 = vmatpush1.msra.mxu0 0.0
    %745 = vmatprep.subr.mxu0 0.0
    %746 = vmatpush1.msra.mxu0 0.0
    %747 = vmatprep.subr.mxu0 0.0
    %748 = vmatpush1.msra.mxu0 0.0
    %749 = vmatprep.subr.mxu0 0.0
    %750 = vmatpush1.msra.mxu0 0.0
    %751 = vmatprep.subr.mxu0 0.0
    %752 = vmatpush1.msra.mxu0 0.0
    %753 = vmatprep.subr.mxu0 0.0
    %754 = vmatpush1.msra.mxu0 0.0
    %755 = vmatprep.subr.mxu0 0.0
    %756 = vmatpush1.msra.mxu0 0.0
    %757 = vmatprep.subr.mxu0 0.0
    %758 = vmatpush1.msra.mxu0 0.0
    %759 = vmatprep.subr.mxu0 0.0
    %760 = vmatpush1.msra.mxu0 0.0
    %761 = vmatprep.subr.mxu0 0.0
    %762 = vmatpush1.msra.mxu0 0.0
    %763 = vmatprep.subr.mxu0 0.0
    %764 = vmatpush1.msra.mxu0 0.0
    %765 = vmatprep.subr.mxu0 0.0
    %766 = vmatpush1.msra.mxu0 0.0
    %767 = vmatprep.subr.mxu0 0.0
    %768 = vmatpush1.msra.mxu0 0.0
    %769 = vmatprep.subr.mxu0 0.0
    %770 = vmatpush1.msra.mxu0 0.0
    %771 = vmatprep.subr.mxu0 0.0
    %772 = vmatpush1.msra.mxu0 0.0
    %773 = vmatprep.subr.mxu0 0.0
    %774 = vmatpush1.msra.mxu0 0.0
    %775 = vmatprep.subr.mxu0 0.0
    %776 = vmatpush1.msra.mxu0 0.0
    %777 = vmatprep.subr.mxu0 0.0
    %778 = vmatpush1.msra.mxu0 0.0
    %779 = vmatprep.subr.mxu0 0.0
    %780 = vmatpush1.msra.mxu0 0.0
    %781 = vmatprep.subr.mxu0 0.0
    %782 = vmatpush1.msra.mxu0 0.0
    %783 = vmatprep.subr.mxu0 0.0
    %784 = vmatpush1.msra.mxu0 0.0
    %785 = vmatprep.subr.mxu0 0.0
    %786 = vmatpush1.msra.mxu0 0.0
    %787 = vmatprep.subr.mxu0 0.0
    %788 = vmatpush1.msra.mxu0 0.0
    %789 = vmatprep.subr.mxu0 0.0
    %790 = vmatpush1.msra.mxu0 0.0
    %791 = vmatprep.subr.mxu0 0.0
    %792 = vmatpush1.msra.mxu0 0.0
    %793 = vmatprep.subr.mxu0 0.0
    %794 = vmatpush1.msra.mxu0 0.0
    %795 = vmatprep.subr.mxu0 0.0
    %796 = vmatpush1.msra.mxu0 0.0
    %797 = vmatprep.subr.mxu0 0.0
    %798 = vmatpush1.msra.mxu0 0.0
    %799 = vmatprep.mubr.f32.mxu0 0.0
    %800 = vmatmul.mubr.f32.gmra.mrb[0].mxu0 %v731
    %v801 = vpop.f32.mrb[0].mxu0
    %v802 = vadd.f32 0.0, %v801
    %v803 = vpop.f32.mrb[0].mxu0
    %804 = vmatprep.mubr.f32.mxu0 0.0
    %805 = vmatmul.mubr.f32.gmra.mrb[0].mxu0 %v733
    %v806 = vpop.f32.mrb[0].mxu0
    %v807 = vadd.f32 0.0, %v806
    %v808 = vpop.f32.mrb[0].mxu0
    %809 = vdwg.mxu0
    %v810 = vadd.f32 %v717, %v802
    %v811 = vadd.f32 %v718, %v807
    %v812 = vld [vmem:[%s625 + $0x2] sm:$0xf]
    %v813 = vld [vmem:[%s625 + $0xa] sm:$0xf]
    %v814 = vld [vmem:[%s625 + $0x12] sm:$0xf]
    %v815 = vld [vmem:[%s625 + $0x1a] sm:$0xf]
    %s816 = scalar_lea.vmem [#allocation6], 64
    %v817 = vld [vmem:[%s816] sm:$0xff]
    %v822 = vcombine.low %v812, %v813
    %v823 = vcombine.low %v814, %v815
    %v824 = vsel %vm88, %v822, 0
    %v826 = vsel %vm88, %v823, 0
    %828 = vmatprep.subr.mxu0 0.0
    %829 = vmatpush1.msra.mxu0 %v817
    %830 = vmatprep.subr.mxu0 0.0
    %831 = vmatpush1.msra.mxu0 0.0
    %832 = vmatprep.subr.mxu0 0.0
    %833 = vmatpush1.msra.mxu0 0.0
    %834 = vmatprep.subr.mxu0 0.0
    %835 = vmatpush1.msra.mxu0 0.0
    %836 = vmatprep.subr.mxu0 0.0
    %837 = vmatpush1.msra.mxu0 0.0
    %838 = vmatprep.subr.mxu0 0.0
    %839 = vmatpush1.msra.mxu0 0.0
    %840 = vmatprep.subr.mxu0 0.0
    %841 = vmatpush1.msra.mxu0 0.0
    %842 = vmatprep.subr.mxu0 0.0
    %843 = vmatpush1.msra.mxu0 0.0
    %844 = vmatprep.subr.mxu0 0.0
    %845 = vmatpush1.msra.mxu0 0.0
    %846 = vmatprep.subr.mxu0 0.0
    %847 = vmatpush1.msra.mxu0 0.0
    %848 = vmatprep.subr.mxu0 0.0
    %849 = vmatpush1.msra.mxu0 0.0
    %850 = vmatprep.subr.mxu0 0.0
    %851 = vmatpush1.msra.mxu0 0.0
    %852 = vmatprep.subr.mxu0 0.0
    %853 = vmatpush1.msra.mxu0 0.0
    %854 = vmatprep.subr.mxu0 0.0
    %855 = vmatpush1.msra.mxu0 0.0
    %856 = vmatprep.subr.mxu0 0.0
    %857 = vmatpush1.msra.mxu0 0.0
    %858 = vmatprep.subr.mxu0 0.0
    %859 = vmatpush1.msra.mxu0 0.0
    %860 = vmatprep.subr.mxu0 0.0
    %861 = vmatpush1.msra.mxu0 0.0
    %862 = vmatprep.subr.mxu0 0.0
    %863 = vmatpush1.msra.mxu0 0.0
    %864 = vmatprep.subr.mxu0 0.0
    %865 = vmatpush1.msra.mxu0 0.0
    %866 = vmatprep.subr.mxu0 0.0
    %867 = vmatpush1.msra.mxu0 0.0
    %868 = vmatprep.subr.mxu0 0.0
    %869 = vmatpush1.msra.mxu0 0.0
    %870 = vmatprep.subr.mxu0 0.0
    %871 = vmatpush1.msra.mxu0 0.0
    %872 = vmatprep.subr.mxu0 0.0
    %873 = vmatpush1.msra.mxu0 0.0
    %874 = vmatprep.subr.mxu0 0.0
    %875 = vmatpush1.msra.mxu0 0.0
    %876 = vmatprep.subr.mxu0 0.0
    %877 = vmatpush1.msra.mxu0 0.0
    %878 = vmatprep.subr.mxu0 0.0
    %879 = vmatpush1.msra.mxu0 0.0
    %880 = vmatprep.subr.mxu0 0.0
    %881 = vmatpush1.msra.mxu0 0.0
    %882 = vmatprep.subr.mxu0 0.0
    %883 = vmatpush1.msra.mxu0 0.0
    %884 = vmatprep.subr.mxu0 0.0
    %885 = vmatpush1.msra.mxu0 0.0
    %886 = vmatprep.subr.mxu0 0.0
    %887 = vmatpush1.msra.mxu0 0.0
    %888 = vmatprep.subr.mxu0 0.0
    %889 = vmatpush1.msra.mxu0 0.0
    %890 = vmatprep.subr.mxu0 0.0
    %891 = vmatpush1.msra.mxu0 0.0
    %892 = vmatprep.mubr.f32.mxu0 0.0
    %893 = vmatmul.mubr.f32.gmra.mrb[0].mxu0 %v824
    %v894 = vpop.f32.mrb[0].mxu0
    %v895 = vadd.f32 0.0, %v894
    %v896 = vpop.f32.mrb[0].mxu0
    %897 = vmatprep.mubr.f32.mxu0 0.0
    %898 = vmatmul.mubr.f32.gmra.mrb[0].mxu0 %v826
    %v899 = vpop.f32.mrb[0].mxu0
    %v900 = vadd.f32 0.0, %v899
    %v901 = vpop.f32.mrb[0].mxu0
    %902 = vdwg.mxu0
    %v903 = vadd.f32 %v810, %v895
    %v904 = vadd.f32 %v811, %v900
    %v906 = vlaneseq
    %v907 = vshrl.u32 %v906, 7
    %v908 = vsub.s32 0, %v907
    %v909 = vrot.slane %v70, %v908
    %v911 = vadd.f32 %v903, %v909
    %v912 = vadd.f32 %v904, %v909
    %v915 = vcombine.high %v911, %v911
    %v916 = vcombine.high %v912, %v912
    %vm919 = vcmask 125952
    %920 = vst.msk [vmem:[#allocation8] sm:$0xf] %vm919, %v911
    %921 = vst.msk [vmem:[#allocation8 + $0x4] sm:$0xf] %vm919, %v915
    %922 = vst.msk [vmem:[#allocation8 + $0x8] sm:$0xf] %vm919, %v912
    %923 = vst.msk [vmem:[#allocation8 + $0xc] sm:$0xf] %vm919, %v916
    // Predicated region
    $region22: #{tpu_custom_call.1} parent=1 // pred_check
      _
    $region23: #{tpu_custom_call.1} parent=1 // pred_check_branch
      %925 = sbr.rel (0) target = $region25
    $region24: #{tpu_custom_call.1} parent=1 // pred_region
      %s927 = ssub.s32 256, 256
      %928 = vsyncadd [#allocation5], %s927
      %s929 = sshll.u32 [#allocation8], 4
      %s930 = int_to_ptr.vmem [resolvable:$true] %s929
      %935 = dma.vmem_to_hbm [thread:$0]  %s930, 256, %s3, [#allocation5], 64, 64, 4
    $region25: #{tpu_custom_call.1} parent=1 // pred_fallthru
      _
    // Predicated region
    $region26: #{tpu_custom_call.1} parent=1 // pred_check
      _
    $region27: #{tpu_custom_call.1} parent=1 // pred_check_branch
      %937 = sbr.rel (0) target = $region29
    $region28: #{tpu_custom_call.1} parent=1 // pred_region
      %938 = dma.done [#allocation5], 256
    $region29: #{tpu_custom_call.1} parent=1 // pred_fallthru
      _
    %939 = vsyncpa [#allocation4], 1
    %940 = vsyncpa [#allocation7], 1
    %941 = vsyncpa [#allocation5], 1

</llo_original>
